<compile_context>
chip_gen: v6e
topology: v6e:2x2x1
jax: 0.10.0
libtpu: 0.0.40
codegen_flags: <defaults>
</compile_context>

<pallas_src>
import functools

import jax
import jax.numpy as jnp
from jax.experimental import pallas as pl
from jax.experimental.pallas import tpu as pltpu

# ---------------- problem sizes (small, consistent with the module) ----------
BATCH = 8
INPUT_SIZE = 16          # number of input features D
FEATURE_SIZE = 24        # F
DECISION_SIZE = 8        # decision slice size (F - DECISION_SIZE = attentive size)
ATT_SIZE = FEATURE_SIZE - DECISION_SIZE
GAMMA = 1.3
_LANE = 128


# ------------------------------ Pallas kernel --------------------------------
def _step_kernel(gamma, dec_size,
                 x_ref, feat_ref, prior_ref,
                 w_att_ref, b_att_ref, w_fc_ref, b_fc_ref,
                 feat_out_ref, mp_ref):
    """Feature-major Step body.  Per batch tile tb:
         x_ref (D, tb)   feat_ref (F, tb)   prior_ref (D, tb)
         w_att_ref (D, A)  b_att_ref (D, 1)
         w_fc_ref  (2F, D) b_fc_ref  (2F, 1)
         feat_out_ref (F, tb)
         mp_ref (2D, tb): rows [0, D) = mask, rows [D, 2D) = relaxed prior.
    """
    x = x_ref[...]                          # (D, tb)
    prior = prior_ref[...]                  # (D, tb)
    # Attentive columns = rows dec_size..F-1; static sublane-aligned slice
    # (dec_size = 8), so no wrapper-side slice pass and no lane shift.
    feat_att = feat_ref[dec_size:, :]       # (A, tb)

    # ---- attentive transformer: Linear (+ folded BN), prior product ----
    z = jnp.dot(w_att_ref[...], feat_att,
                preferred_element_type=jnp.float32) + b_att_ref[...]    # (D, tb)
    z = z * prior

    # ---- sparsemax along the feature axis (axis 0), exact & sort-free ----
    # ge[j, i, b] = z[j, b] >= z[i, b]; both reductions run over the LEADING
    # axis, i.e. plain elementwise vreg adds on the VPU (no cross-lane XLU).
    zb = z[:, None, :]                                                  # (D,1,tb)
    ge = zb >= z[None, :, :]                                            # (D,D,tb)
    r = jnp.sum(ge.astype(jnp.float32), axis=0)                         # (D, tb)
    S = jnp.sum(jnp.where(ge, zb, 0.0), axis=0)                         # (D, tb)
    valid = (1.0 + r * z) > S
    # Row max is always valid, so k >= 1 and the -1e30 sentinel never wins.
    # r == k is exact (small integer-valued floats, D << 2^24).
    k = jnp.max(jnp.where(valid, r, 0.0), axis=0, keepdims=True)        # (1, tb)
    S_sel = jnp.max(jnp.where(valid & (r == k), S, -1e30),
                    axis=0, keepdims=True)                              # (1, tb)
    tau = (S_sel - 1.0) / k
    mask = jnp.maximum(z - tau, 0.0)                                    # (D, tb)

    # ---- mask + relaxed prior ('gamma_fixed') in one output stream ----
    d = x.shape[0]
    mp_ref[0:d, :] = mask
    mp_ref[d:2 * d, :] = prior * (gamma - mask)

    # ---- feature transformer: single MXU pass for both GLU halves ----
    mx = mask * x                                                       # (D, tb)
    h = jnp.dot(w_fc_ref[...], mx,
                preferred_element_type=jnp.float32) + b_fc_ref[...]     # (2F, tb)
    f = h.shape[0] // 2
    feat_out_ref[...] = h[:f, :] * jax.nn.sigmoid(h[f:, :])             # (F, tb)


# ------------------------------ wrapper ---------------------------------------
def step_forward(x, feature, prior, params, *, block_b=2048):
    """Runs the fused Step kernel. Returns (decision, feature, mask, prior)."""
    B, D = x.shape
    F = feature.shape[1]
    A = F - DECISION_SIZE

    # Fold eval-mode BatchNorm (mean=0, var=1, weight=1, bias=0) into the
    # linears and transpose the (tiny) weights into the feature-major layout.
    # TODO(synk): training-mode (batch-statistics / ghost) BatchNorm is not modeled.
    eps = 1e-5
    s = 1.0 / jnp.sqrt(1.0 + eps)
    w_att_t = (params["w_att"] * s).T                   # (D, A)
    b_att_t = (params["b_att"] * s).reshape(-1, 1)      # (D, 1)
    w_fc_t = (params["w_fc"] * s).T                     # (2F, D)
    b_fc_t = (params["b_fc"] * s).reshape(-1, 1)        # (2F, 1)

    # gamma baked as a compile-time constant — no SMEM input / DMA.
    # TODO(synk): a traced / learnable gamma under jit would need an SMEM scalar input.
    kernel = functools.partial(_step_kernel, float(params["gamma"]), DECISION_SIZE)

    # ---- batch tiling: lane-dense tiles (multiples of 128), padded batch ----
    b128 = pl.cdiv(B, _LANE) * _LANE
    if b128 <= _LANE:
        tb = b128                                       # single lane-dense tile
    else:
        # aim for >= 2 grid steps so both v7x TensorCores get work
        tb = min(block_b, pl.cdiv(b128 // 2, _LANE) * _LANE)
    b_pad = pl.cdiv(b128, tb) * tb
    grid = (b_pad // tb,)

    def to_fm(a):   # (B, n) -> (n, b_pad): feature-major, zero-padded batch
        return jnp.pad(a.T, ((0, 0), (0, b_pad - B)))

    # TODO(synk): in a full TabNet, fuse all Steps into one pallas_call so the
    # feature-major x / feature / prior stay resident in VMEM across steps
    # (the transposes below then disappear entirely).
    x_t, feat_t, prior_t = to_fm(x), to_fm(feature), to_fm(prior)

    def tile(nrows):
        return pl.BlockSpec((nrows, tb), lambda i: (0, i))

    def full(arr):
        return pl.BlockSpec(arr.shape, lambda i: (0, 0))

    out_shape = (
        jax.ShapeDtypeStruct((F, b_pad), jnp.float32),       # feature (feature-major)
        jax.ShapeDtypeStruct((2 * D, b_pad), jnp.float32),   # [mask; prior'] (feature-major)
    )

    cost = pl.CostEstimate(
        flops=int(b_pad) * (2 * A * D + 2 * D * 2 * F + 10 * D * D + 16 * D),
        transcendentals=int(b_pad) * F,
        bytes_accessed=4 * (int(b_pad) * (3 * D + 2 * F + F)
                            + D * A + 2 * F * D + D + 2 * F),
    )

    feat_out_t, mp_t = pl.pallas_call(
        kernel,
        out_shape=out_shape,
        grid=grid,
        in_specs=[
            tile(D),          # x
            tile(F),          # feature (attentive rows sliced in-kernel)
            tile(D),          # prior
            full(w_att_t), full(b_att_t),
            full(w_fc_t), full(b_fc_t),
        ],
        out_specs=(tile(F), tile(2 * D)),
        compiler_params=pltpu.CompilerParams(
            dimension_semantics=("parallel",)),
        cost_estimate=cost,
    )(x_t, feat_t, prior_t, w_att_t, b_att_t, w_fc_t, b_fc_t)

    # Un-pad / un-transpose back to the module's (batch, features) layout.
    feat_out = feat_out_t[:, :B].T
    mask = mp_t[:D, :B].T
    prior_new = mp_t[D:, :B].T
    # Decision is a cheap view + ReLU of the feature output.
    decision = jnp.maximum(feat_out[:, :DECISION_SIZE], 0.0)
    return decision, feat_out, mask, prior_new


# ------------------------------ pure-JAX reference ---------------------------
def _sparsemax_ref(z):
    zs = jnp.flip(jnp.sort(z, axis=-1), axis=-1)
    d = z.shape[-1]
    css = jnp.cumsum(zs, axis=-1)
    rng = jnp.arange(1, d + 1, dtype=z.dtype)
    valid = 1.0 + rng * zs > css
    k = jnp.sum(valid.astype(jnp.int32), axis=-1, keepdims=True)
    tau = (jnp.take_along_axis(css, k - 1, axis=-1) - 1.0) / k.astype(z.dtype)
    return jnp.maximum(z - tau, 0.0)


def step_reference(x, feature, prior, params):
    eps = 1e-5
    s = 1.0 / jnp.sqrt(1.0 + eps)
    z = (feature[:, DECISION_SIZE:] @ (params["w_att"] * s)
         + params["b_att"] * s) * prior
    mask = _sparsemax_ref(z)
    prior_new = prior * (params["gamma"] - mask)
    h = (mask * x) @ (params["w_fc"] * s) + params["b_fc"] * s
    feat_out = h[:, :FEATURE_SIZE] * jax.nn.sigmoid(h[:, FEATURE_SIZE:])
    dec = jnp.maximum(feat_out[:, :DECISION_SIZE], 0.0)
    return dec, feat_out, mask, prior_new


# ----------------------------------- main -------------------------------------
if __name__ == "__main__":
    key = jax.random.PRNGKey(0)
    k_x, k_f, k_wa, k_ba, k_wf, k_bf = jax.random.split(key, 6)

    x = jax.random.normal(k_x, (BATCH, INPUT_SIZE), dtype=jnp.float32)
    feature = jax.random.normal(k_f, (BATCH, FEATURE_SIZE), dtype=jnp.float32)
    prior = jnp.ones((BATCH, INPUT_SIZE), dtype=jnp.float32)

    params = {
        "w_att": 0.3 * jax.random.normal(k_wa, (ATT_SIZE, INPUT_SIZE), jnp.float32),
        "b_att": 0.1 * jax.random.normal(k_ba, (INPUT_SIZE,), jnp.float32),
        "w_fc": 0.3 * jax.random.normal(k_wf, (INPUT_SIZE, 2 * FEATURE_SIZE), jnp.float32),
        "b_fc": 0.1 * jax.random.normal(k_bf, (2 * FEATURE_SIZE,), jnp.float32),
        "gamma": GAMMA,
    }

    outs = step_forward(x, feature, prior, params)
    outs = jax.block_until_ready(outs)

    refs = step_reference(x, feature, prior, params)
    for o, r in zip(outs, refs):
        assert o.shape == r.shape and o.dtype == r.dtype
        assert jnp.allclose(o, r, atol=1e-5, rtol=1e-5), "mismatch vs reference"

    print("KERNEL_OK")
</pallas_src>

<mosaic_0001>
module attributes {stable_mosaic.version = 11 : i64} {
  func.func @_step_kernel(%arg0: i32, %arg1: memref<16x128xf32, #tpu.memory_space<vmem>>, %arg2: memref<24x128xf32, #tpu.memory_space<vmem>>, %arg3: memref<16x128xf32, #tpu.memory_space<vmem>>, %arg4: memref<16x16xf32, #tpu.memory_space<vmem>>, %arg5: memref<16x1xf32, #tpu.memory_space<vmem>>, %arg6: memref<48x16xf32, #tpu.memory_space<vmem>>, %arg7: memref<48x1xf32, #tpu.memory_space<vmem>>, %arg8: memref<24x128xf32, #tpu.memory_space<vmem>>, %arg9: memref<32x128xf32, #tpu.memory_space<vmem>>) attributes {dimension_semantics = [#tpu.dimension_semantics<parallel>], iteration_bounds = array<i64: 1>, scalar_prefetch = 0 : i64, scratch_operands = 0 : i64, tpu.core_type = #tpu.core_type<tc>, window_params = [{transform_indices = @transform_0, window_bounds = array<i64: 16, 128>}, {transform_indices = @transform_1, window_bounds = array<i64: 24, 128>}, {transform_indices = @transform_2, window_bounds = array<i64: 16, 128>}, {pipeline_mode = #tpu.pipeline_mode<synchronous>, transform_indices = @transform_3, window_bounds = array<i64: 16, 16>}, {pipeline_mode = #tpu.pipeline_mode<synchronous>, transform_indices = @transform_4, window_bounds = array<i64: 16, 1>}, {pipeline_mode = #tpu.pipeline_mode<synchronous>, transform_indices = @transform_5, window_bounds = array<i64: 48, 16>}, {pipeline_mode = #tpu.pipeline_mode<synchronous>, transform_indices = @transform_6, window_bounds = array<i64: 48, 1>}, {transform_indices = @transform_7, window_bounds = array<i64: 24, 128>}, {transform_indices = @transform_8, window_bounds = array<i64: 32, 128>}]} {
    %c0 = arith.constant 0 : index
    %c0_0 = arith.constant 0 : index
    %0 = vector.load %arg1[%c0, %c0_0] : memref<16x128xf32, #tpu.memory_space<vmem>>, vector<16x128xf32>
    %c0_1 = arith.constant 0 : index
    %c0_2 = arith.constant 0 : index
    %1 = vector.load %arg3[%c0_1, %c0_2] : memref<16x128xf32, #tpu.memory_space<vmem>>, vector<16x128xf32>
    %c8 = arith.constant 8 : index
    %c0_3 = arith.constant 0 : index
    %2 = vector.load %arg2[%c8, %c0_3] : memref<24x128xf32, #tpu.memory_space<vmem>>, vector<16x128xf32>
    %c0_4 = arith.constant 0 : index
    %c0_5 = arith.constant 0 : index
    %3 = vector.load %arg4[%c0_4, %c0_5] : memref<16x16xf32, #tpu.memory_space<vmem>>, vector<16x16xf32>
    %cst = arith.constant dense<0.000000e+00> : vector<16x128xf32>
    %4 = tpu.matmul %3, %2, %cst {dimension_numbers = #tpu.dot_dimension_numbers<[1], [0], [0], [1], [0, 0, 1, 1], [], []>} : vector<16x16xf32>, vector<16x128xf32>, vector<16x128xf32> -> vector<16x128xf32>
    %c0_6 = arith.constant 0 : index
    %c0_7 = arith.constant 0 : index
    %5 = vector.load %arg5[%c0_6, %c0_7] : memref<16x1xf32, #tpu.memory_space<vmem>>, vector<16x1xf32>
    %6 = vector.broadcast %5 : vector<16x1xf32> to vector<16x128xf32>
    %7 = arith.addf %4, %6 : vector<16x128xf32>
    %8 = arith.mulf %7, %1 : vector<16x128xf32>
    %9 = vector.shape_cast %8 : vector<16x128xf32> to vector<16x1x128xf32>
    %10 = vector.shape_cast %8 : vector<16x128xf32> to vector<1x16x128xf32>
    %11 = vector.broadcast %9 : vector<16x1x128xf32> to vector<16x16x128xf32>
    %12 = vector.broadcast %10 : vector<1x16x128xf32> to vector<16x16x128xf32>
    %13 = arith.cmpf oge, %11, %12 : vector<16x16x128xf32>
    %14 = arith.extui %13 : vector<16x16x128xi1> to vector<16x16x128xi32>
    %15 = arith.sitofp %14 : vector<16x16x128xi32> to vector<16x16x128xf32>
    %cst_8 = arith.constant dense<0.000000e+00> : vector<16x128xf32>
    %16 = vector.multi_reduction <add>, %15, %cst_8 [0] : vector<16x16x128xf32> to vector<16x128xf32>
    %cst_9 = arith.constant 0.000000e+00 : f32
    %17 = vector.shape_cast %9 : vector<16x1x128xf32> to vector<16x1x128xf32>
    %18 = vector.broadcast %17 : vector<16x1x128xf32> to vector<16x16x128xf32>
    %19 = vector.broadcast %cst_9 : f32 to vector<16x16x128xf32>
    %20 = arith.select %13, %18, %19 : vector<16x16x128xi1>, vector<16x16x128xf32>
    %cst_10 = arith.constant dense<0.000000e+00> : vector<16x128xf32>
    %21 = vector.multi_reduction <add>, %20, %cst_10 [0] : vector<16x16x128xf32> to vector<16x128xf32>
    %22 = arith.mulf %16, %8 : vector<16x128xf32>
    %cst_11 = arith.constant 1.000000e+00 : f32
    %23 = vector.broadcast %cst_11 : f32 to vector<16x128xf32>
    %24 = arith.addf %23, %22 : vector<16x128xf32>
    %25 = arith.cmpf ogt, %24, %21 : vector<16x128xf32>
    %cst_12 = arith.constant 0.000000e+00 : f32
    %26 = vector.broadcast %cst_12 : f32 to vector<16x128xf32>
    %27 = arith.select %25, %16, %26 : vector<16x128xi1>, vector<16x128xf32>
    %cst_13 = arith.constant dense<0xFF800000> : vector<128xf32>
    %28 = vector.multi_reduction <maximumf>, %27, %cst_13 [0] : vector<16x128xf32> to vector<128xf32>
    %29 = vector.shape_cast %28 : vector<128xf32> to vector<1x128xf32>
    %30 = vector.broadcast %29 : vector<1x128xf32> to vector<16x128xf32>
    %31 = arith.cmpf oeq, %16, %30 : vector<16x128xf32>
    %32 = arith.andi %25, %31 : vector<16x128xi1>
    %cst_14 = arith.constant -1.000000e+30 : f32
    %33 = vector.broadcast %cst_14 : f32 to vector<16x128xf32>
    %34 = arith.select %32, %21, %33 : vector<16x128xi1>, vector<16x128xf32>
    %cst_15 = arith.constant dense<0xFF800000> : vector<128xf32>
    %35 = vector.multi_reduction <maximumf>, %34, %cst_15 [0] : vector<16x128xf32> to vector<128xf32>
    %36 = vector.shape_cast %35 : vector<128xf32> to vector<1x128xf32>
    %cst_16 = arith.constant 1.000000e+00 : f32
    %37 = vector.broadcast %cst_16 : f32 to vector<1x128xf32>
    %38 = arith.subf %36, %37 : vector<1x128xf32>
    %39 = arith.divf %38, %29 : vector<1x128xf32>
    %40 = vector.broadcast %39 : vector<1x128xf32> to vector<16x128xf32>
    %41 = arith.subf %8, %40 : vector<16x128xf32>
    %cst_17 = arith.constant 0.000000e+00 : f32
    %42 = vector.broadcast %cst_17 : f32 to vector<16x128xf32>
    %43 = arith.maximumf %41, %42 : vector<16x128xf32>
    %c0_18 = arith.constant 0 : index
    %c0_19 = arith.constant 0 : index
    %44 = vector.load %arg9[%c0_18, %c0_19] : memref<32x128xf32, #tpu.memory_space<vmem>>, vector<16x128xf32>
    tpu.vector_store %arg9[%c0_18, %c0_19], %43 {strides = array<i32>} : memref<32x128xf32, #tpu.memory_space<vmem>>, vector<16x128xf32>,
    %cst_20 = arith.constant 1.300000e+00 : f32
    %45 = vector.broadcast %cst_20 : f32 to vector<16x128xf32>
    %46 = arith.subf %45, %43 : vector<16x128xf32>
    %47 = arith.mulf %1, %46 : vector<16x128xf32>
    %c16 = arith.constant 16 : index
    %c0_21 = arith.constant 0 : index
    %48 = vector.load %arg9[%c16, %c0_21] : memref<32x128xf32, #tpu.memory_space<vmem>>, vector<16x128xf32>
    tpu.vector_store %arg9[%c16, %c0_21], %47 {strides = array<i32>} : memref<32x128xf32, #tpu.memory_space<vmem>>, vector<16x128xf32>,
    %49 = arith.mulf %43, %0 : vector<16x128xf32>
    %c0_22 = arith.constant 0 : index
    %c0_23 = arith.constant 0 : index
    %50 = vector.load %arg6[%c0_22, %c0_23] : memref<48x16xf32, #tpu.memory_space<vmem>>, vector<48x16xf32>
    %cst_24 = arith.constant dense<0.000000e+00> : vector<48x128xf32>
    %51 = tpu.matmul %50, %49, %cst_24 {dimension_numbers = #tpu.dot_dimension_numbers<[1], [0], [0], [1], [0, 0, 1, 1], [], []>} : vector<48x16xf32>, vector<16x128xf32>, vector<48x128xf32> -> vector<48x128xf32>
    %c0_25 = arith.constant 0 : index
    %c0_26 = arith.constant 0 : index
    %52 = vector.load %arg7[%c0_25, %c0_26] : memref<48x1xf32, #tpu.memory_space<vmem>>, vector<48x1xf32>
    %53 = vector.broadcast %52 : vector<48x1xf32> to vector<48x128xf32>
    %54 = arith.addf %51, %53 : vector<48x128xf32>
    %55 = vector.extract_strided_slice %54 {offsets = [0, 0], sizes = [24, 128], strides = [1, 1]} : vector<48x128xf32> to vector<24x128xf32>
    %56 = vector.extract_strided_slice %54 {offsets = [24, 0], sizes = [24, 128], strides = [1, 1]} : vector<48x128xf32> to vector<24x128xf32>
    %57 = arith.negf %56 : vector<24x128xf32>
    %58 = math.exp %57 : vector<24x128xf32>
    %cst_27 = arith.constant 1.000000e+00 : f32
    %59 = vector.broadcast %cst_27 : f32 to vector<24x128xf32>
    %60 = arith.addf %59, %58 : vector<24x128xf32>
    %61 = arith.divf %59, %60 : vector<24x128xf32>
    %62 = arith.mulf %55, %61 : vector<24x128xf32>
    %c0_28 = arith.constant 0 : index
    %c0_29 = arith.constant 0 : index
    %63 = vector.load %arg8[%c0_28, %c0_29] : memref<24x128xf32, #tpu.memory_space<vmem>>, vector<24x128xf32>
    tpu.vector_store %arg8[%c0_28, %c0_29], %62 {strides = array<i32>} : memref<24x128xf32, #tpu.memory_space<vmem>>, vector<24x128xf32>,
    return
  }
  func.func @transform_0(%arg0: i32) -> (i32, i32) {
    %c0_i32 = arith.constant 0 : i32
    %c0_i32_0 = arith.constant 0 : i32
    return %c0_i32, %arg0 : i32, i32
  }
  func.func @transform_1(%arg0: i32) -> (i32, i32) {
    %c0_i32 = arith.constant 0 : i32
    %c0_i32_0 = arith.constant 0 : i32
    return %c0_i32, %arg0 : i32, i32
  }
  func.func @transform_2(%arg0: i32) -> (i32, i32) {
    %c0_i32 = arith.constant 0 : i32
    %c0_i32_0 = arith.constant 0 : i32
    return %c0_i32, %arg0 : i32, i32
  }
  func.func @transform_3(%arg0: i32) -> (i32, i32) {
    %c0_i32 = arith.constant 0 : i32
    %c0_i32_0 = arith.constant 0 : i32
    %c0_i32_1 = arith.constant 0 : i32
    return %c0_i32, %c0_i32_0 : i32, i32
  }
  func.func @transform_4(%arg0: i32) -> (i32, i32) {
    %c0_i32 = arith.constant 0 : i32
    %c0_i32_0 = arith.constant 0 : i32
    %c0_i32_1 = arith.constant 0 : i32
    return %c0_i32, %c0_i32_0 : i32, i32
  }
  func.func @transform_5(%arg0: i32) -> (i32, i32) {
    %c0_i32 = arith.constant 0 : i32
    %c0_i32_0 = arith.constant 0 : i32
    %c0_i32_1 = arith.constant 0 : i32
    return %c0_i32, %c0_i32_0 : i32, i32
  }
  func.func @transform_6(%arg0: i32) -> (i32, i32) {
    %c0_i32 = arith.constant 0 : i32
    %c0_i32_0 = arith.constant 0 : i32
    %c0_i32_1 = arith.constant 0 : i32
    return %c0_i32, %c0_i32_0 : i32, i32
  }
  func.func @transform_7(%arg0: i32) -> (i32, i32) {
    %c0_i32 = arith.constant 0 : i32
    %c0_i32_0 = arith.constant 0 : i32
    return %c0_i32, %arg0 : i32, i32
  }
  func.func @transform_8(%arg0: i32) -> (i32, i32) {
    %c0_i32 = arith.constant 0 : i32
    %c0_i32_0 = arith.constant 0 : i32
    return %c0_i32, %arg0 : i32, i32
  }
}

</mosaic_0001>

<llo_original>
// kernel: tpu_custom_call.1
$region0: #{tpu_custom_call.1}
  #allocation0 [shape = 'u32[]', space=smem, size = 0x4, offset = 0x4, fixed_abs, tag = 'smem constant byte address 0x4 - core index']
  #allocation1 [shape = 'u32[144,128]{1,0:T(1,128)}', space=vmem, size = 0x12000, scoped, tag = 'internal scratch']
  %s0 = inlined_call_operand.vmem [shape: f32[16,128], index: 0, kind: input, shape index: {}]
  %s1 = inlined_call_operand.vmem [shape: f32[24,128], index: 1, kind: input, shape index: {}]
  %s2 = inlined_call_operand.vmem [shape: f32[16,128], index: 2, kind: input, shape index: {}]
  %s3 = inlined_call_operand.vmem [shape: f32[16,16], index: 3, kind: input, shape index: {}]
  %s4 = inlined_call_operand.vmem [shape: f32[16,1], index: 4, kind: input, shape index: {}]
  %s5 = inlined_call_operand.vmem [shape: f32[48,16], index: 5, kind: input, shape index: {}]
  %s6 = inlined_call_operand.vmem [shape: f32[48,1], index: 6, kind: input, shape index: {}]
  %s7 = inlined_call_operand.hbm [shape: f32[24,128], index: 7, kind: output, shape index: {0}]
  %s8 = inlined_call_operand.hbm [shape: f32[32,128], index: 8, kind: output, shape index: {1}]
  %9 = xla_tuple %s7, %s8
  %s10 = sld [smem:[#allocation0]]
  $region46: #{tpu_custom_call.1} parent=0
    _
  %s12 = ssub.s32 1, %s10
  %s13 = scalar_select 0, %s12, %s10
  $region1: #{tpu_custom_call.1} parent=0
    #allocation2 [shape = 'u8[12288]{0}', space=vmem, size = 0x3000, scoped, tag = 'output window, operand 0, single buffered']
    #allocation3 [shape = 's32[1]{0}', space=sflag, size = 0x4, scoped, tag = 'scoped memory for tpu_custom_call.1']
    #allocation4 [shape = 'u8[16384]{0}', space=vmem, size = 0x4000, scoped, tag = 'output window, operand 1, single buffered']
    #allocation5 [shape = 's32[1]{0}', space=sflag, size = 0x4, scoped, tag = 'scoped memory for tpu_custom_call.1']
    %14 = vsyncpa [#allocation3], 0
    %15 = vsyncpa [#allocation5], 0
    // Predicated region
    $region2: #{tpu_custom_call.1} parent=1 // pred_check
      _
    $region3: #{tpu_custom_call.1} parent=1 // pred_check_branch
      %17 = sbr.rel (0) target = $region5
    $region4: #{tpu_custom_call.1} parent=1 // pred_region
      _
    $region5: #{tpu_custom_call.1} parent=1 // pred_fallthru
      _
    // Predicated region
    $region6: #{tpu_custom_call.1} parent=1 // pred_check
      _
    $region7: #{tpu_custom_call.1} parent=1 // pred_check_branch
      %19 = sbr.rel (0) target = $region9
    $region8: #{tpu_custom_call.1} parent=1 // pred_region
      _
    $region9: #{tpu_custom_call.1} parent=1 // pred_fallthru
      _
    // Predicated region
    $region10: #{tpu_custom_call.1} parent=1 // pred_check
      _
    $region11: #{tpu_custom_call.1} parent=1 // pred_check_branch
      %21 = sbr.rel (0) target = $region13
    $region12: #{tpu_custom_call.1} parent=1 // pred_region
      _
    $region13: #{tpu_custom_call.1} parent=1 // pred_fallthru
      _
    // Predicated region
    $region14: #{tpu_custom_call.1} parent=1 // pred_check
      _
    $region15: #{tpu_custom_call.1} parent=1 // pred_check_branch
      %23 = sbr.rel (0) target = $region17
    $region16: #{tpu_custom_call.1} parent=1 // pred_region
      _
    $region17: #{tpu_custom_call.1} parent=1 // pred_fallthru
      _
    // Predicated region
    $region18: #{tpu_custom_call.1} parent=1 // pred_check
      _
    $region19: #{tpu_custom_call.1} parent=1 // pred_check_branch
      %25 = sbr.rel (0) target = $region21
    $region20: #{tpu_custom_call.1} parent=1 // pred_region
      _
    $region21: #{tpu_custom_call.1} parent=1 // pred_fallthru
      _
    // Predicated region
    $region22: #{tpu_custom_call.1} parent=1 // pred_check
      _
    $region23: #{tpu_custom_call.1} parent=1 // pred_check_branch
      %27 = sbr.rel (0) target = $region25
    $region24: #{tpu_custom_call.1} parent=1 // pred_region
      _
    $region25: #{tpu_custom_call.1} parent=1 // pred_fallthru
      _
    // Predicated region
    $region26: #{tpu_custom_call.1} parent=1 // pred_check
      _
    $region27: #{tpu_custom_call.1} parent=1 // pred_check_branch
      %29 = sbr.rel (0) target = $region29
    $region28: #{tpu_custom_call.1} parent=1 // pred_region
      _
    $region29: #{tpu_custom_call.1} parent=1 // pred_fallthru
      _
    %v30 = vld [vmem:[%s0] sm:$0xff]
    %v31 = vld [vmem:[%s0 + $0x8] sm:$0xff]
    %v32 = vld [vmem:[%s2] sm:$0xff]
    %v33 = vld [vmem:[%s2 + $0x8] sm:$0xff]
    %v34 = vld [vmem:[%s1 + $0x8] sm:$0xff]
    %v35 = vld [vmem:[%s1 + $0x10] sm:$0xff]
    %v36 = vld [vmem:[%s3] sm:$0xff]
    %v37 = vld [vmem:[%s3 + $0x8] sm:$0xff]
    %v38 = vld [vmem:[%s4] sm:$0xff]
    %v39 = vld [vmem:[%s4 + $0x8] sm:$0xff]
    %41 = vset.pattern.permute.xlu0 0
    %42 = vperm.xlu0 %41, %v38
    %v43 = vpop.permute.xlu0 %42
    %46 = vset.pattern.permute.xlu0 0
    %47 = vperm.xlu0 %46, %v39
    %v48 = vpop.permute.xlu0 %47
    %vm50 = vcmask 130048
    %v52 = vsel %vm50, %v36, 0
    %v55 = vsel %vm50, %v37, 0
    %57 = vmatprep.subr.mxu0 0.0
    %58 = vmatpush1.msra.mxu0 0.0
    %59 = vmatprep.subr.mxu0 0.0
    %60 = vmatpush1.msra.mxu0 0.0
    %61 = vmatprep.subr.mxu0 0.0
    %62 = vmatpush1.msra.mxu0 0.0
    %63 = vmatprep.subr.mxu0 0.0
    %64 = vmatpush1.msra.mxu0 0.0
    %65 = vmatprep.subr.mxu0 0.0
    %66 = vmatpush1.msra.mxu0 0.0
    %67 = vmatprep.subr.mxu0 0.0
    %68 = vmatpush1.msra.mxu0 0.0
    %69 = vmatprep.subr.mxu0 0.0
    %70 = vmatpush1.msra.mxu0 0.0
    %71 = vmatprep.subr.mxu0 0.0
    %72 = vmatpush1.msra.mxu0 0.0
    %73 = vmatprep.subr.mxu0 0.0
    %74 = vmatpush1.msra.mxu0 0.0
    %75 = vmatprep.subr.mxu0 0.0
    %76 = vmatpush1.msra.mxu0 0.0
    %77 = vmatprep.subr.mxu0 0.0
    %78 = vmatpush1.msra.mxu0 0.0
    %79 = vmatprep.subr.mxu0 0.0
    %80 = vmatpush1.msra.mxu0 0.0
    %81 = vmatprep.subr.mxu0 0.0
    %82 = vmatpush1.msra.mxu0 0.0
    %83 = vmatprep.subr.mxu0 0.0
    %84 = vmatpush1.msra.mxu0 0.0
    %85 = vmatprep.subr.mxu0 0.0
    %86 = vmatpush1.msra.mxu0 %v35
    %87 = vmatprep.subr.mxu0 0.0
    %88 = vmatpush1.msra.mxu0 %v34
    %89 = vmatprep.subr.mxu0 0.0
    %90 = vmatpush2.msra.mxu0 0.0
    %91 = vmatprep.subr.mxu0 0.0
    %92 = vmatpush2.msra.mxu0 0.0
    %93 = vmatprep.subr.mxu0 0.0
    %94 = vmatpush2.msra.mxu0 0.0
    %95 = vmatprep.subr.mxu0 0.0
    %96 = vmatpush2.msra.mxu0 0.0
    %97 = vmatprep.subr.mxu0 0.0
    %98 = vmatpush2.msra.mxu0 0.0
    %99 = vmatprep.subr.mxu0 0.0
    %100 = vmatpush2.msra.mxu0 0.0
    %101 = vmatprep.subr.mxu0 0.0
    %102 = vmatpush2.msra.mxu0 0.0
    %103 = vmatprep.subr.mxu0 0.0
    %104 = vmatpush2.msra.mxu0 0.0
    %105 = vmatprep.subr.mxu0 0.0
    %106 = vmatpush2.msra.mxu0 0.0
    %107 = vmatprep.subr.mxu0 0.0
    %108 = vmatpush2.msra.mxu0 0.0
    %109 = vmatprep.subr.mxu0 0.0
    %110 = vmatpush2.msra.mxu0 0.0
    %111 = vmatprep.subr.mxu0 0.0
    %112 = vmatpush2.msra.mxu0 0.0
    %113 = vmatprep.subr.mxu0 0.0
    %114 = vmatpush2.msra.mxu0 0.0
    %115 = vmatprep.subr.mxu0 0.0
    %116 = vmatpush2.msra.mxu0 0.0
    %117 = vmatprep.subr.mxu0 0.0
    %118 = vmatpush2.msra.mxu0 0.0
    %119 = vmatprep.subr.mxu0 0.0
    %120 = vmatpush2.msra.mxu0 0.0
    %121 = vmatprep.mubr.f32.mxu0 0.0
    %122 = vmatmul.mubr.f32.gmra.mxu0 %v52
    %v123 = vpop.f32.mrf.mxu0
    %v124 = vadd.f32 %v43, %v123
    %v125 = vpop.f32.mrf.mxu0
    %126 = vmatprep.mubr.f32.mxu0 0.0
    %127 = vmatmul.mubr.f32.gmra.mxu0 %v55
    %v128 = vpop.f32.mrf.mxu0
    %v129 = vadd.f32 %v48, %v128
    %v130 = vpop.f32.mrf.mxu0
    %131 = vdwg.mxu0
    %v132 = vmul.f32 %v124, %v32
    %v133 = vmul.f32 %v129, %v33
    %v136 = vcombine.high %v132, %v132
    %v138 = vunpack.c.l.s4 1966171168
    %v139 = vunpack.c.0.s8 %v138
    %v140 = vlaneseq
    %v141 = vshrl.u32 %v140, 7
    %v142 = vsub.s32 %v139, %v141
    %v143 = vrot.slane %v132, %v142
    %v145 = vunpack.c.l.s4 1966171168
    %v146 = vunpack.c.0.s8 %v145
    %v147 = vlaneseq
    %v148 = vshrl.u32 %v147, 7
    %v149 = vsub.s32 %v146, %v148
    %v150 = vrot.slane %v136, %v149
    %v151 = vcombine.high %v143, %v143
    %v152 = vcombine.high %v150, %v150
    %v154 = vunpack.c.l.s4 1966171168
    %v155 = vunpack.c.0.s8 %v154
    %v156 = vlaneseq
    %v157 = vshrl.u32 %v156, 7
    %v158 = vsub.s32 %v155, %v157
    %v159 = vrot.slane %v143, %v158
    %v161 = vunpack.c.l.s4 1966171168
    %v162 = vunpack.c.0.s8 %v161
    %v163 = vlaneseq
    %v164 = vshrl.u32 %v163, 7
    %v165 = vsub.s32 %v162, %v164
    %v166 = vrot.slane %v150, %v165
    %v168 = vunpack.c.l.s4 1966171168
    %v169 = vunpack.c.0.s8 %v168
    %v170 = vlaneseq
    %v171 = vshrl.u32 %v170, 7
    %v172 = vsub.s32 %v169, %v171
    %v173 = vrot.slane %v151, %v172
    %v175 = vunpack.c.l.s4 1966171168
    %v176 = vunpack.c.0.s8 %v175
    %v177 = vlaneseq
    %v178 = vshrl.u32 %v177, 7
    %v179 = vsub.s32 %v176, %v178
    %v180 = vrot.slane %v152, %v179
    %v181 = vcombine.high %v159, %v159
    %v182 = vcombine.high %v166, %v166
    %v183 = vcombine.high %v173, %v173
    %v184 = vcombine.high %v180, %v180
    %v185 = vcombine.high %v133, %v133
    %v187 = vunpack.c.l.s4 1966171168
    %v188 = vunpack.c.0.s8 %v187
    %v189 = vlaneseq
    %v190 = vshrl.u32 %v189, 7
    %v191 = vsub.s32 %v188, %v190
    %v192 = vrot.slane %v133, %v191
    %v194 = vunpack.c.l.s4 1966171168
    %v195 = vunpack.c.0.s8 %v194
    %v196 = vlaneseq
    %v197 = vshrl.u32 %v196, 7
    %v198 = vsub.s32 %v195, %v197
    %v199 = vrot.slane %v185, %v198
    %v200 = vcombine.high %v192, %v192
    %v201 = vcombine.high %v199, %v199
    %v203 = vunpack.c.l.s4 1966171168
    %v204 = vunpack.c.0.s8 %v203
    %v205 = vlaneseq
    %v206 = vshrl.u32 %v205, 7
    %v207 = vsub.s32 %v204, %v206
    %v208 = vrot.slane %v192, %v207
    %v210 = vunpack.c.l.s4 1966171168
    %v211 = vunpack.c.0.s8 %v210
    %v212 = vlaneseq
    %v213 = vshrl.u32 %v212, 7
    %v214 = vsub.s32 %v211, %v213
    %v215 = vrot.slane %v199, %v214
    %v217 = vunpack.c.l.s4 1966171168
    %v218 = vunpack.c.0.s8 %v217
    %v219 = vlaneseq
    %v220 = vshrl.u32 %v219, 7
    %v221 = vsub.s32 %v218, %v220
    %v222 = vrot.slane %v200, %v221
    %v224 = vunpack.c.l.s4 1966171168
    %v225 = vunpack.c.0.s8 %v224
    %v226 = vlaneseq
    %v227 = vshrl.u32 %v226, 7
    %v228 = vsub.s32 %v225, %v227
    %v229 = vrot.slane %v201, %v228
    %v230 = vcombine.high %v208, %v208
    %v231 = vcombine.high %v215, %v215
    %v232 = vcombine.high %v222, %v222
    %v233 = vcombine.high %v229, %v229
    %v234 = vlaneseq
    %v235 = vshrl.u32 %v234, 7
    %v236 = vsub.s32 0, %v235
    %v237 = vrot.slane %v159, %v236
    %v238 = vlaneseq
    %v239 = vshrl.u32 %v238, 7
    %v240 = vsub.s32 0, %v239
    %v241 = vrot.slane %v173, %v240
    %v242 = vlaneseq
    %v243 = vshrl.u32 %v242, 7
    %v244 = vsub.s32 0, %v243
    %v245 = vrot.slane %v181, %v244
    %v246 = vlaneseq
    %v247 = vshrl.u32 %v246, 7
    %v248 = vsub.s32 0, %v247
    %v249 = vrot.slane %v183, %v248
    %v250 = vlaneseq
    %v251 = vshrl.u32 %v250, 7
    %v252 = vsub.s32 0, %v251
    %v253 = vrot.slane %v166, %v252
    %v254 = vlaneseq
    %v255 = vshrl.u32 %v254, 7
    %v256 = vsub.s32 0, %v255
    %v257 = vrot.slane %v180, %v256
    %v258 = vlaneseq
    %v259 = vshrl.u32 %v258, 7
    %v260 = vsub.s32 0, %v259
    %v261 = vrot.slane %v182, %v260
    %v262 = vlaneseq
    %v263 = vshrl.u32 %v262, 7
    %v264 = vsub.s32 0, %v263
    %v265 = vrot.slane %v184, %v264
    %v266 = vlaneseq
    %v267 = vshrl.u32 %v266, 7
    %v268 = vsub.s32 0, %v267
    %v269 = vrot.slane %v208, %v268
    %v270 = vlaneseq
    %v271 = vshrl.u32 %v270, 7
    %v272 = vsub.s32 0, %v271
    %v273 = vrot.slane %v222, %v272
    %v274 = vlaneseq
    %v275 = vshrl.u32 %v274, 7
    %v276 = vsub.s32 0, %v275
    %v277 = vrot.slane %v230, %v276
    %v278 = vlaneseq
    %v279 = vshrl.u32 %v278, 7
    %v280 = vsub.s32 0, %v279
    %v281 = vrot.slane %v232, %v280
    %v282 = vlaneseq
    %v283 = vshrl.u32 %v282, 7
    %v284 = vsub.s32 0, %v283
    %v285 = vrot.slane %v215, %v284
    %v286 = vlaneseq
    %v287 = vshrl.u32 %v286, 7
    %v288 = vsub.s32 0, %v287
    %v289 = vrot.slane %v229, %v288
    %v290 = vlaneseq
    %v291 = vshrl.u32 %v290, 7
    %v292 = vsub.s32 0, %v291
    %v293 = vrot.slane %v231, %v292
    %v294 = vlaneseq
    %v295 = vshrl.u32 %v294, 7
    %v296 = vsub.s32 0, %v295
    %v297 = vrot.slane %v233, %v296
    %vm314 = vcmp.ge.f32.partialorder %v237, %v132
    %vm315 = vcmp.ge.f32.partialorder %v237, %v133
    %vm316 = vcmp.ge.f32.partialorder %v241, %v132
    %vm317 = vcmp.ge.f32.partialorder %v241, %v133
    %vm318 = vcmp.ge.f32.partialorder %v245, %v132
    %vm319 = vcmp.ge.f32.partialorder %v245, %v133
    %vm320 = vcmp.ge.f32.partialorder %v249, %v132
    %vm321 = vcmp.ge.f32.partialorder %v249, %v133
    %vm322 = vcmp.ge.f32.partialorder %v253, %v132
    %vm323 = vcmp.ge.f32.partialorder %v253, %v133
    %vm324 = vcmp.ge.f32.partialorder %v257, %v132
    %vm325 = vcmp.ge.f32.partialorder %v257, %v133
    %vm326 = vcmp.ge.f32.partialorder %v261, %v132
    %vm327 = vcmp.ge.f32.partialorder %v261, %v133
    %vm328 = vcmp.ge.f32.partialorder %v265, %v132
    %vm329 = vcmp.ge.f32.partialorder %v265, %v133
    %vm330 = vcmp.ge.f32.partialorder %v269, %v132
    %vm331 = vcmp.ge.f32.partialorder %v269, %v133
    %vm332 = vcmp.ge.f32.partialorder %v273, %v132
    %vm333 = vcmp.ge.f32.partialorder %v273, %v133
    %vm334 = vcmp.ge.f32.partialorder %v277, %v132
    %vm335 = vcmp.ge.f32.partialorder %v277, %v133
    %vm336 = vcmp.ge.f32.partialorder %v281, %v132
    %vm337 = vcmp.ge.f32.partialorder %v281, %v133
    %vm338 = vcmp.ge.f32.partialorder %v285, %v132
    %vm339 = vcmp.ge.f32.partialorder %v285, %v133
    %vm340 = vcmp.ge.f32.partialorder %v289, %v132
    %vm341 = vcmp.ge.f32.partialorder %v289, %v133
    %vm342 = vcmp.ge.f32.partialorder %v293, %v132
    %vm343 = vcmp.ge.f32.partialorder %v293, %v133
    %vm344 = vcmp.ge.f32.partialorder %v297, %v132
    %vm345 = vcmp.ge.f32.partialorder %v297, %v133
    %v346 = vsel %vm314, 1, 0
    %v347 = vsel %vm315, 1, 0
    %v348 = vsel %vm316, 1, 0
    %v349 = vsel %vm317, 1, 0
    %v350 = vsel %vm318, 1, 0
    %v351 = vsel %vm319, 1, 0
    %v352 = vsel %vm320, 1, 0
    %v353 = vsel %vm321, 1, 0
    %v354 = vsel %vm322, 1, 0
    %v355 = vsel %vm323, 1, 0
    %v356 = vsel %vm324, 1, 0
    %v357 = vsel %vm325, 1, 0
    %v358 = vsel %vm326, 1, 0
    %v359 = vsel %vm327, 1, 0
    %v360 = vsel %vm328, 1, 0
    %v361 = vsel %vm329, 1, 0
    %v362 = vsel %vm330, 1, 0
    %v363 = vsel %vm331, 1, 0
    %v364 = vsel %vm332, 1, 0
    %v365 = vsel %vm333, 1, 0
    %v366 = vsel %vm334, 1, 0
    %v367 = vsel %vm335, 1, 0
    %v368 = vsel %vm336, 1, 0
    %v369 = vsel %vm337, 1, 0
    %v370 = vsel %vm338, 1, 0
    %v371 = vsel %vm339, 1, 0
    %v372 = vsel %vm340, 1, 0
    %v373 = vsel %vm341, 1, 0
    %v374 = vsel %vm342, 1, 0
    %v375 = vsel %vm343, 1, 0
    %v376 = vsel %vm344, 1, 0
    %v377 = vsel %vm345, 1, 0
    %v378 = vcvt.s32.f32 %v346
    %v379 = vcvt.s32.f32 %v347
    %v380 = vcvt.s32.f32 %v348
    %v381 = vcvt.s32.f32 %v349
    %v382 = vcvt.s32.f32 %v350
    %v383 = vcvt.s32.f32 %v351
    %v384 = vcvt.s32.f32 %v352
    %v385 = vcvt.s32.f32 %v353
    %v386 = vcvt.s32.f32 %v354
    %v387 = vcvt.s32.f32 %v355
    %v388 = vcvt.s32.f32 %v356
    %v389 = vcvt.s32.f32 %v357
    %v390 = vcvt.s32.f32 %v358
    %v391 = vcvt.s32.f32 %v359
    %v392 = vcvt.s32.f32 %v360
    %v393 = vcvt.s32.f32 %v361
    %v394 = vcvt.s32.f32 %v362
    %v395 = vcvt.s32.f32 %v363
    %v396 = vcvt.s32.f32 %v364
    %v397 = vcvt.s32.f32 %v365
    %v398 = vcvt.s32.f32 %v366
    %v399 = vcvt.s32.f32 %v367
    %v400 = vcvt.s32.f32 %v368
    %v401 = vcvt.s32.f32 %v369
    %v402 = vcvt.s32.f32 %v370
    %v403 = vcvt.s32.f32 %v371
    %v404 = vcvt.s32.f32 %v372
    %v405 = vcvt.s32.f32 %v373
    %v406 = vcvt.s32.f32 %v374
    %v407 = vcvt.s32.f32 %v375
    %v408 = vcvt.s32.f32 %v376
    %v409 = vcvt.s32.f32 %v377
    %v410 = vadd.f32 %v378, %v380
    %v411 = vadd.f32 %v410, %v382
    %v412 = vadd.f32 %v411, %v384
    %v413 = vadd.f32 %v412, %v386
    %v414 = vadd.f32 %v413, %v388
    %v415 = vadd.f32 %v414, %v390
    %v416 = vadd.f32 %v415, %v392
    %v417 = vadd.f32 %v416, %v394
    %v418 = vadd.f32 %v417, %v396
    %v419 = vadd.f32 %v418, %v398
    %v420 = vadd.f32 %v419, %v400
    %v421 = vadd.f32 %v420, %v402
    %v422 = vadd.f32 %v421, %v404
    %v423 = vadd.f32 %v422, %v406
    %v424 = vadd.f32 %v423, %v408
    %v425 = vadd.f32 %v379, %v381
    %v426 = vadd.f32 %v425, %v383
    %v427 = vadd.f32 %v426, %v385
    %v428 = vadd.f32 %v427, %v387
    %v429 = vadd.f32 %v428, %v389
    %v430 = vadd.f32 %v429, %v391
    %v431 = vadd.f32 %v430, %v393
    %v432 = vadd.f32 %v431, %v395
    %v433 = vadd.f32 %v432, %v397
    %v434 = vadd.f32 %v433, %v399
    %v435 = vadd.f32 %v434, %v401
    %v436 = vadd.f32 %v435, %v403
    %v437 = vadd.f32 %v436, %v405
    %v438 = vadd.f32 %v437, %v407
    %v439 = vadd.f32 %v438, %v409
    %v440 = vsel %vm314, %v237, 0.0
    %v441 = vsel %vm315, %v237, 0.0
    %v442 = vsel %vm316, %v241, 0.0
    %v443 = vsel %vm317, %v241, 0.0
    %v444 = vsel %vm318, %v245, 0.0
    %v445 = vsel %vm319, %v245, 0.0
    %v446 = vsel %vm320, %v249, 0.0
    %v447 = vsel %vm321, %v249, 0.0
    %v448 = vsel %vm322, %v253, 0.0
    %v449 = vsel %vm323, %v253, 0.0
    %v450 = vsel %vm324, %v257, 0.0
    %v451 = vsel %vm325, %v257, 0.0
    %v452 = vsel %vm326, %v261, 0.0
    %v453 = vsel %vm327, %v261, 0.0
    %v454 = vsel %vm328, %v265, 0.0
    %v455 = vsel %vm329, %v265, 0.0
    %v456 = vsel %vm330, %v269, 0.0
    %v457 = vsel %vm331, %v269, 0.0
    %v458 = vsel %vm332, %v273, 0.0
    %v459 = vsel %vm333, %v273, 0.0
    %v460 = vsel %vm334, %v277, 0.0
    %v461 = vsel %vm335, %v277, 0.0
    %v462 = vsel %vm336, %v281, 0.0
    %v463 = vsel %vm337, %v281, 0.0
    %v464 = vsel %vm338, %v285, 0.0
    %v465 = vsel %vm339, %v285, 0.0
    %v466 = vsel %vm340, %v289, 0.0
    %v467 = vsel %vm341, %v289, 0.0
    %v468 = vsel %vm342, %v293, 0.0
    %v469 = vsel %vm343, %v293, 0.0
    %v470 = vsel %vm344, %v297, 0.0
    %v471 = vsel %vm345, %v297, 0.0
    %v472 = vadd.f32 %v440, %v442
    %v473 = vadd.f32 %v472, %v444
    %v474 = vadd.f32 %v473, %v446
    %v475 = vadd.f32 %v474, %v448
    %v476 = vadd.f32 %v475, %v450
    %v477 = vadd.f32 %v476, %v452
    %v478 = vadd.f32 %v477, %v454
    %v479 = vadd.f32 %v478, %v456
    %v480 = vadd.f32 %v479, %v458
    %v481 = vadd.f32 %v480, %v460
    %v482 = vadd.f32 %v481, %v462
    %v483 = vadd.f32 %v482, %v464
    %v484 = vadd.f32 %v483, %v466
    %v485 = vadd.f32 %v484, %v468
    %v486 = vadd.f32 %v485, %v470
    %v487 = vadd.f32 %v441, %v443
    %v488 = vadd.f32 %v487, %v445
    %v489 = vadd.f32 %v488, %v447
    %v490 = vadd.f32 %v489, %v449
    %v491 = vadd.f32 %v490, %v451
    %v492 = vadd.f32 %v491, %v453
    %v493 = vadd.f32 %v492, %v455
    %v494 = vadd.f32 %v493, %v457
    %v495 = vadd.f32 %v494, %v459
    %v496 = vadd.f32 %v495, %v461
    %v497 = vadd.f32 %v496, %v463
    %v498 = vadd.f32 %v497, %v465
    %v499 = vadd.f32 %v498, %v467
    %v500 = vadd.f32 %v499, %v469
    %v501 = vadd.f32 %v500, %v471
    %v502 = vmul.f32 %v424, %v132
    %v503 = vmul.f32 %v439, %v133
    %v504 = vadd.f32 %v502, 1.0
    %v505 = vadd.f32 %v503, 1.0
    %vm506 = vcmp.gt.f32.partialorder %v504, %v486
    %vm507 = vcmp.gt.f32.partialorder %v505, %v501
    %v508 = vsel %vm506, %v424, 0.0
    %v509 = vsel %vm507, %v439, 0.0
    %v510 = vmax.f32 %v508, %v509
    %v511 = vrot.slane %v510, 4
    %v512 = vmax.f32 %v510, %v511
    %v513 = vrot.slane %v512, 2
    %v514 = vmax.f32 %v512, %v513
    %v515 = vrot.slane %v514, 1
    %v516 = vmax.f32 %v514, %v515
    %vm517 = vcmp.eq.f32.partialorder %v424, %v516
    %vm518 = vcmp.eq.f32.partialorder %v439, %v516
    %vm519 = vmand %vm506, %vm517
    %vm520 = vmand %vm507, %vm518
    %v521 = vsel %vm519, %v486, -1e+30
    %v522 = vsel %vm520, %v501, -1e+30
    %v523 = vmax.f32 %v521, %v522
    %v524 = vrot.slane %v523, 4
    %v525 = vmax.f32 %v523, %v524
    %v526 = vrot.slane %v525, 2
    %v527 = vmax.f32 %v525, %v526
    %v528 = vrot.slane %v527, 1
    %v529 = vmax.f32 %v527, %v528
    %v530 = vsub.f32 %v529, 1.0
    %v531 = vrcp.pop %v516
    %v532 = vmul.f32 %v530, %v531
    %v533 = vsub.f32 %v132, %v532
    %v534 = vsub.f32 %v133, %v532
    %v535 = vmax.f32 %v533, 0.0
    %v536 = vmax.f32 %v534, 0.0
    %537 = vst [vmem:[#allocation4] sm:$0xff] %v535
    %538 = vst [vmem:[#allocation4 + $0x8] sm:$0xff] %v536
    %v539 = vsub.f32 1.3, %v535
    %v540 = vsub.f32 1.3, %v536
    %v541 = vmul.f32 %v32, %v539
    %v542 = vmul.f32 %v33, %v540
    %543 = vst [vmem:[#allocation4 + $0x10] sm:$0xff] %v541
    %544 = vst [vmem:[#allocation4 + $0x18] sm:$0xff] %v542
    %v545 = vmul.f32 %v535, %v30
    %v546 = vmul.f32 %v536, %v31
    %v547 = vld [vmem:[%s5] sm:$0xff]
    %v548 = vld [vmem:[%s5 + $0x8] sm:$0xff]
    %v549 = vld [vmem:[%s5 + $0x10] sm:$0xff]
    %v550 = vld [vmem:[%s5 + $0x18] sm:$0xff]
    %v551 = vld [vmem:[%s5 + $0x20] sm:$0xff]
    %v552 = vld [vmem:[%s5 + $0x28] sm:$0xff]
    %v553 = vld [vmem:[%s6] sm:$0xff]
    %v554 = vld [vmem:[%s6 + $0x8] sm:$0xff]
    %v555 = vld [vmem:[%s6 + $0x10] sm:$0xff]
    %v556 = vld [vmem:[%s6 + $0x18] sm:$0xff]
    %v557 = vld [vmem:[%s6 + $0x20] sm:$0xff]
    %v558 = vld [vmem:[%s6 + $0x28] sm:$0xff]
    %560 = vset.pattern.permute.xlu0 0
    %561 = vperm.xlu0 %560, %v553
    %v562 = vpop.permute.xlu0 %561
    %565 = vset.pattern.permute.xlu0 0
    %566 = vperm.xlu0 %565, %v554
    %v567 = vpop.permute.xlu0 %566
    %570 = vset.pattern.permute.xlu0 0
    %571 = vperm.xlu0 %570, %v555
    %v572 = vpop.permute.xlu0 %571
    %575 = vset.pattern.permute.xlu0 0
    %576 = vperm.xlu0 %575, %v556
    %v577 = vpop.permute.xlu0 %576
    %580 = vset.pattern.permute.xlu0 0
    %581 = vperm.xlu0 %580, %v557
    %v582 = vpop.permute.xlu0 %581
    %585 = vset.pattern.permute.xlu0 0
    %586 = vperm.xlu0 %585, %v558
    %v587 = vpop.permute.xlu0 %586
    %v590 = vsel %vm50, %v547, 0
    %v593 = vsel %vm50, %v548, 0
    %v596 = vsel %vm50, %v549, 0
    %v599 = vsel %vm50, %v550, 0
    %v602 = vsel %vm50, %v551, 0
    %v605 = vsel %vm50, %v552, 0
    %607 = vmatprep.subr.mxu0 0.0
    %608 = vmatpush1.msra.mxu0 0.0
    %609 = vmatprep.subr.mxu0 0.0
    %610 = vmatpush1.msra.mxu0 0.0
    %611 = vmatprep.subr.mxu0 0.0
    %612 = vmatpush1.msra.mxu0 0.0
    %613 = vmatprep.subr.mxu0 0.0
    %614 = vmatpush1.msra.mxu0 0.0
    %615 = vmatprep.subr.mxu0 0.0
    %616 = vmatpush1.msra.mxu0 0.0
    %617 = vmatprep.subr.mxu0 0.0
    %618 = vmatpush1.msra.mxu0 0.0
    %619 = vmatprep.subr.mxu0 0.0
    %620 = vmatpush1.msra.mxu0 0.0
    %621 = vmatprep.subr.mxu0 0.0
    %622 = vmatpush1.msra.mxu0 0.0
    %623 = vmatprep.subr.mxu0 0.0
    %624 = vmatpush1.msra.mxu0 0.0
    %625 = vmatprep.subr.mxu0 0.0
    %626 = vmatpush1.msra.mxu0 0.0
    %627 = vmatprep.subr.mxu0 0.0
    %628 = vmatpush1.msra.mxu0 0.0
    %629 = vmatprep.subr.mxu0 0.0
    %630 = vmatpush1.msra.mxu0 0.0
    %631 = vmatprep.subr.mxu0 0.0
    %632 = vmatpush1.msra.mxu0 0.0
    %633 = vmatprep.subr.mxu0 0.0
    %634 = vmatpush1.msra.mxu0 0.0
    %635 = vmatprep.subr.mxu0 0.0
    %636 = vmatpush1.msra.mxu0 %v546
    %637 = vmatprep.subr.mxu0 0.0
    %638 = vmatpush1.msra.mxu0 %v545
    %639 = vmatprep.subr.mxu0 0.0
    %640 = vmatpush2.msra.mxu0 0.0
    %641 = vmatprep.subr.mxu0 0.0
    %642 = vmatpush2.msra.mxu0 0.0
    %643 = vmatprep.subr.mxu0 0.0
    %644 = vmatpush2.msra.mxu0 0.0
    %645 = vmatprep.subr.mxu0 0.0
    %646 = vmatpush2.msra.mxu0 0.0
    %647 = vmatprep.subr.mxu0 0.0
    %648 = vmatpush2.msra.mxu0 0.0
    %649 = vmatprep.subr.mxu0 0.0
    %650 = vmatpush2.msra.mxu0 0.0
    %651 = vmatprep.subr.mxu0 0.0
    %652 = vmatpush2.msra.mxu0 0.0
    %653 = vmatprep.subr.mxu0 0.0
    %654 = vmatpush2.msra.mxu0 0.0
    %655 = vmatprep.subr.mxu0 0.0
    %656 = vmatpush2.msra.mxu0 0.0
    %657 = vmatprep.subr.mxu0 0.0
    %658 = vmatpush2.msra.mxu0 0.0
    %659 = vmatprep.subr.mxu0 0.0
    %660 = vmatpush2.msra.mxu0 0.0
    %661 = vmatprep.subr.mxu0 0.0
    %662 = vmatpush2.msra.mxu0 0.0
    %663 = vmatprep.subr.mxu0 0.0
    %664 = vmatpush2.msra.mxu0 0.0
    %665 = vmatprep.subr.mxu0 0.0
    %666 = vmatpush2.msra.mxu0 0.0
    %667 = vmatprep.subr.mxu0 0.0
    %668 = vmatpush2.msra.mxu0 0.0
    %669 = vmatprep.subr.mxu0 0.0
    %670 = vmatpush2.msra.mxu0 0.0
    %671 = vmatprep.mubr.f32.mxu0 0.0
    %672 = vmatmul.mubr.f32.gmra.mxu0 %v590
    %v673 = vpop.f32.mrf.mxu0
    %v674 = vadd.f32 %v562, %v673
    %v675 = vpop.f32.mrf.mxu0
    %676 = vmatprep.mubr.f32.mxu0 0.0
    %677 = vmatmul.mubr.f32.gmra.mxu0 %v593
    %v678 = vpop.f32.mrf.mxu0
    %v679 = vadd.f32 %v567, %v678
    %v680 = vpop.f32.mrf.mxu0
    %681 = vmatprep.mubr.f32.mxu0 0.0
    %682 = vmatmul.mubr.f32.gmra.mxu0 %v596
    %v683 = vpop.f32.mrf.mxu0
    %v684 = vadd.f32 %v572, %v683
    %v685 = vpop.f32.mrf.mxu0
    %686 = vmatprep.mubr.f32.mxu0 0.0
    %687 = vmatmul.mubr.f32.gmra.mxu0 %v599
    %v688 = vpop.f32.mrf.mxu0
    %v689 = vadd.f32 %v577, %v688
    %v690 = vpop.f32.mrf.mxu0
    %691 = vmatprep.mubr.f32.mxu0 0.0
    %692 = vmatmul.mubr.f32.gmra.mxu0 %v602
    %v693 = vpop.f32.mrf.mxu0
    %v694 = vadd.f32 %v582, %v693
    %v695 = vpop.f32.mrf.mxu0
    %696 = vmatprep.mubr.f32.mxu0 0.0
    %697 = vmatmul.mubr.f32.gmra.mxu0 %v605
    %v698 = vpop.f32.mrf.mxu0
    %v699 = vadd.f32 %v587, %v698
    %v700 = vpop.f32.mrf.mxu0
    %701 = vdwg.mxu0
    %v702 = vxor.u32 %v689, 2147483648
    %v703 = vxor.u32 %v694, 2147483648
    %v704 = vxor.u32 %v699, 2147483648
    %v705 = vmul.f32 %v702, 1.442695
    %v706 = vpow.pop %v705
    %v707 = vmul.f32 %v703, 1.442695
    %v708 = vpow.pop %v707
    %v709 = vmul.f32 %v704, 1.442695
    %v710 = vpow.pop %v709
    %v711 = vadd.f32 %v706, 1.0
    %v712 = vadd.f32 %v708, 1.0
    %v713 = vadd.f32 %v710, 1.0
    %v714 = vrcp.pop %v711
    %v715 = vmul.f32 1.0, %v714
    %v716 = vrcp.pop %v712
    %v717 = vmul.f32 1.0, %v716
    %v718 = vrcp.pop %v713
    %v719 = vmul.f32 1.0, %v718
    %v720 = vmul.f32 %v674, %v715
    %v721 = vmul.f32 %v679, %v717
    %v722 = vmul.f32 %v684, %v719
    %723 = vst [vmem:[#allocation2] sm:$0xff] %v720
    %724 = vst [vmem:[#allocation2 + $0x8] sm:$0xff] %v721
    %725 = vst [vmem:[#allocation2 + $0x10] sm:$0xff] %v722
    // Predicated region
    $region30: #{tpu_custom_call.1} parent=1 // pred_check
      _
    $region31: #{tpu_custom_call.1} parent=1 // pred_check_branch
      %727 = sbr.rel (0) target = $region33
    $region32: #{tpu_custom_call.1} parent=1 // pred_region
      %s729 = ssub.s32 384, 384
      %730 = vsyncadd [#allocation3], %s729
      %s731 = sshll.u32 [#allocation2], 4
      %s732 = int_to_ptr.vmem [resolvable:$true] %s731
      %737 = dma.vmem_to_hbm [thread:$0]  %s732, 384, %s7, [#allocation3], 128, 128, 8
    $region33: #{tpu_custom_call.1} parent=1 // pred_fallthru
      _
    // Predicated region
    $region34: #{tpu_custom_call.1} parent=1 // pred_check
      _
    $region35: #{tpu_custom_call.1} parent=1 // pred_check_branch
      %739 = sbr.rel (0) target = $region37
    $region36: #{tpu_custom_call.1} parent=1 // pred_region
      %s741 = ssub.s32 512, 512
      %742 = vsyncadd [#allocation5], %s741
      %s743 = sshll.u32 [#allocation4], 4
      %s744 = int_to_ptr.vmem [resolvable:$true] %s743
      %749 = dma.vmem_to_hbm [thread:$0]  %s744, 512, %s8, [#allocation5], 128, 128, 8
    $region37: #{tpu_custom_call.1} parent=1 // pred_fallthru
      _
    // Predicated region
    $region38: #{tpu_custom_call.1} parent=1 // pred_check
      _
    $region39: #{tpu_custom_call.1} parent=1 // pred_check_branch
      %751 = sbr.rel (0) target = $region41
    $region40: #{tpu_custom_call.1} parent=1 // pred_region
      %752 = dma.done [#allocation3], 384
    $region41: #{tpu_custom_call.1} parent=1 // pred_fallthru
      _
    // Predicated region
    $region42: #{tpu_custom_call.1} parent=1 // pred_check
      _
    $region43: #{tpu_custom_call.1} parent=1 // pred_check_branch
      %754 = sbr.rel (0) target = $region45
    $region44: #{tpu_custom_call.1} parent=1 // pred_region
      %755 = dma.done [#allocation5], 512
    $region45: #{tpu_custom_call.1} parent=1 // pred_fallthru
      _
    %756 = vsyncpa [#allocation3], 1
    %757 = vsyncpa [#allocation5], 1

</llo_original>
